<compile_context>
chip_gen: v6e
topology: v6e:2x2x1
jax: 0.10.0
libtpu: 0.0.40
codegen_flags: <defaults>
</compile_context>

<pallas_src>
import functools

import jax
import jax.numpy as jnp
from jax.experimental import pallas as pl
from jax.experimental.pallas import tpu as pltpu


# --------------------------------------------------------------------------- #
# Kernel
# --------------------------------------------------------------------------- #
def _adala_kernel(x_ref, s_ref, w_ref, b_ref, o_ref, *, num_features):
    F = num_features

    # LayerNorm over the feature (last) axis, eps=1e-5, no affine params.
    # One-pass statistics in f32: mean and E[x^2] from a single read of x.
    x = x_ref[...].astype(jnp.float32)
    inv_f = jnp.float32(1.0 / F)
    mean = jnp.sum(x, axis=-1, keepdims=True) * inv_f
    mean_sq = jnp.sum(x * x, axis=-1, keepdims=True) * inv_f
    var = jnp.maximum(mean_sq - mean * mean, 0.0)
    xn = (x - mean) * jax.lax.rsqrt(var + 1e-5)

    # Fused style projection: one [TB, D] x [D, 2F] matmul on the MXU in the
    # inputs' native dtype, accumulating in f32. Split into scale / shift.
    proj = jnp.dot(s_ref[...], w_ref[...], preferred_element_type=jnp.float32)
    proj = proj + b_ref[...].astype(jnp.float32)
    scale = proj[:, :F]
    shift = proj[:, F:]

    o_ref[...] = (scale * xn + shift).astype(o_ref.dtype)


# --------------------------------------------------------------------------- #
# Parameter fusion (call once at init time, NOT per forward call)
# --------------------------------------------------------------------------- #
def fuse_adala_params(w_scale, b_scale, w_shift, b_shift):
    """Weights stored [style_dim, num_features]; biases [num_features] or [1, F]."""
    D, F = w_scale.shape
    w_cat = jnp.concatenate([w_scale, w_shift], axis=1)          # [D, 2F]
    b_cat = jnp.concatenate(
        [b_scale.reshape(1, F), b_shift.reshape(1, F)], axis=1)  # [1, 2F]
    return w_cat, b_cat


# --------------------------------------------------------------------------- #
# Tiling / VMEM budgeting
# --------------------------------------------------------------------------- #
def _round_up(v, m):
    return ((v + m - 1) // m) * m


def _select_tiling(B, F, D, x_dtype, style_dtype, w_dtype, out_dtype):
    """Pick (tb, vmem_limit_bytes) from the generation's VMEM capacity."""
    try:
        vmem_phys = int(pltpu.get_tpu_info().vmem_capacity_bytes)
    except Exception:  # pragma: no cover - conservative fallback
        vmem_phys = 64 << 20  # assume v7x-sized VMEM

    if vmem_phys >= (100 << 20):      # v5e / v6e: 128 MiB physical
        vmem_limit = 100 << 20
        block_b = 1024
    else:                             # v7x: 64 MiB physical
        vmem_limit = 48 << 20
        block_b = 256

    x_b = jnp.dtype(x_dtype).itemsize
    s_b = jnp.dtype(style_dtype).itemsize
    w_b = jnp.dtype(w_dtype).itemsize
    o_b = jnp.dtype(out_dtype).itemsize

    # Weight/bias block (budget 2x in case single-buffering is unavailable).
    weight_bytes = 2 * (D * 2 * F * w_b + 2 * F * w_b)

    # Per-row live bytes: x (2 bufs) + out (2 bufs) + style (2 bufs)
    # + proj f32 + LN f32 temps (x_f32, xn).
    row_bytes = (2 * F * x_b + 2 * F * o_b + 2 * D * s_b
                 + 2 * F * 4 + 2 * F * 4)

    budget = int(vmem_limit * 0.85) - weight_bytes
    tb_budget = max(8, (budget // max(row_bytes, 1)) // 8 * 8)

    tb = min(block_b, tb_budget)
    if B <= tb:
        # Guarantee >= 2 grid steps where possible so v7x's 2 TensorCores
        # both get work (no effect on correctness for 1-TC chips).
        tb = min(tb, max(8, _round_up(pl.cdiv(B, 2), 8)))
    tb = min(tb, max(8, _round_up(B, 8)))
    return tb, vmem_limit


def _resident_spec(block_shape):
    """Constant-index-map (VMEM-resident) spec; single-buffer if supported."""
    try:
        return pl.BlockSpec(block_shape, lambda i: (0, 0),
                            pipeline_mode=pl.Buffered(1))
    except (TypeError, AttributeError):
        return pl.BlockSpec(block_shape, lambda i: (0, 0))


# --------------------------------------------------------------------------- #
# Forward wrapper
# --------------------------------------------------------------------------- #
def adala_forward(x, style, w_cat, b_cat):
    """x: [B, F]; style: [B, D]; fused weight [D, 2F]; fused bias [1, 2F]."""
    B, F = x.shape
    _, D = style.shape
    assert w_cat.shape == (D, 2 * F) and b_cat.shape == (1, 2 * F)
    assert F % 128 == 0, "num_features must be a multiple of 128 (lane-dense stores)"

    tb, vmem_limit = _select_tiling(B, F, D, x.dtype, style.dtype,
                                    w_cat.dtype, x.dtype)
    grid = (pl.cdiv(B, tb),)

    kernel = functools.partial(_adala_kernel, num_features=F)

    itemsize = jnp.dtype(x.dtype).itemsize
    flops = 2 * B * D * (2 * F) + 10 * B * F
    bytes_accessed = (2 * B * F * itemsize                        # x in + out
                      + B * D * jnp.dtype(style.dtype).itemsize   # style
                      + w_cat.size * jnp.dtype(w_cat.dtype).itemsize
                      + b_cat.size * jnp.dtype(b_cat.dtype).itemsize)

    return pl.pallas_call(
        kernel,
        out_shape=jax.ShapeDtypeStruct((B, F), x.dtype),
        grid_spec=pltpu.PrefetchScalarGridSpec(
            num_scalar_prefetch=0,
            grid=grid,
            in_specs=[
                pl.BlockSpec((tb, F), lambda i: (i, 0)),   # x: streamed per tile
                pl.BlockSpec((tb, D), lambda i: (i, 0)),   # style: streamed per tile
                _resident_spec((D, 2 * F)),                # fused weight: resident
                _resident_spec((1, 2 * F)),                # fused bias: resident
            ],
            out_specs=pl.BlockSpec((tb, F), lambda i: (i, 0)),
        ),
        compiler_params=pltpu.CompilerParams(
            dimension_semantics=("parallel",),
            vmem_limit_bytes=vmem_limit,
        ),
        cost_estimate=pl.CostEstimate(
            flops=flops, transcendentals=B, bytes_accessed=bytes_accessed),
    )(x, style, w_cat, b_cat)


# --------------------------------------------------------------------------- #
# Pure-JAX reference (mirrors the torch module, two-pass LN)
# --------------------------------------------------------------------------- #
def adala_reference(x, style, w_scale, b_scale, w_shift, b_shift):
    xf = x.astype(jnp.float32)
    mean = jnp.mean(xf, axis=-1, keepdims=True)
    var = jnp.mean((xf - mean) ** 2, axis=-1, keepdims=True)
    xn = (xf - mean) * jax.lax.rsqrt(var + 1e-5)
    scale = style.astype(jnp.float32) @ w_scale + b_scale
    shift = style.astype(jnp.float32) @ w_shift + b_shift
    return (scale * xn + shift).astype(x.dtype)


if __name__ == "__main__":
    B, F, D = 8, 128, 64  # batch, num_features, style_dim

    key = jax.random.PRNGKey(0)
    kx, ks, k1, k2, k3, k4 = jax.random.split(key, 6)

    x = jax.random.normal(kx, (B, F), dtype=jnp.float32)
    style = jax.random.normal(ks, (B, D), dtype=jnp.float32)

    # nn.Linear-style uniform(-1/sqrt(D), 1/sqrt(D)) init, weights stored [D, F].
    bound = 1.0 / jnp.sqrt(jnp.float32(D))
    w_scale = jax.random.uniform(k1, (D, F), jnp.float32, -bound, bound)
    b_scale = jax.random.uniform(k2, (1, F), jnp.float32, -bound, bound)
    w_shift = jax.random.uniform(k3, (D, F), jnp.float32, -bound, bound)
    b_shift = jax.random.uniform(k4, (1, F), jnp.float32, -bound, bound)

    # Fuse once at "init time" (hoisted out of the forward call).
    w_cat, b_cat = fuse_adala_params(w_scale, b_scale, w_shift, b_shift)
    w_cat = jax.block_until_ready(w_cat)
    b_cat = jax.block_until_ready(b_cat)

    out = adala_forward(x, style, w_cat, b_cat)
    out = jax.block_until_ready(out)

    ref = adala_reference(x, style, w_scale, b_scale, w_shift, b_shift)
    assert out.shape == (B, F)
    assert jnp.allclose(out, ref, atol=1e-4, rtol=1e-4), "mismatch vs reference"

    print("KERNEL_OK")
</pallas_src>

<mosaic_0001>
module attributes {stable_mosaic.version = 11 : i64} {
  func.func @_adala_kernel(%arg0: i32, %arg1: memref<8x128xf32, #tpu.memory_space<vmem>>, %arg2: memref<8x64xf32, #tpu.memory_space<vmem>>, %arg3: memref<64x256xf32, #tpu.memory_space<vmem>>, %arg4: memref<1x256xf32, #tpu.memory_space<vmem>>, %arg5: memref<8x128xf32, #tpu.memory_space<vmem>>) attributes {dimension_semantics = [#tpu.dimension_semantics<parallel>], iteration_bounds = array<i64: 1>, scalar_prefetch = 0 : i64, scratch_operands = 0 : i64, tpu.core_type = #tpu.core_type<tc>, window_params = [{transform_indices = @transform_0, window_bounds = array<i64: 8, 128>}, {transform_indices = @transform_1, window_bounds = array<i64: 8, 64>}, {pipeline_mode = #tpu.pipeline_mode<synchronous>, transform_indices = @transform_2, window_bounds = array<i64: 64, 256>}, {pipeline_mode = #tpu.pipeline_mode<synchronous>, transform_indices = @transform_3, window_bounds = array<i64: 1, 256>}, {transform_indices = @transform_4, window_bounds = array<i64: 8, 128>}]} {
    %c0 = arith.constant 0 : index
    %c0_0 = arith.constant 0 : index
    %0 = vector.load %arg1[%c0, %c0_0] : memref<8x128xf32, #tpu.memory_space<vmem>>, vector<8x128xf32>
    %cst = arith.constant dense<0.000000e+00> : vector<8xf32>
    %1 = vector.multi_reduction <add>, %0, %cst [1] : vector<8x128xf32> to vector<8xf32>
    %2 = vector.shape_cast %1 : vector<8xf32> to vector<8x1xf32>
    %cst_1 = arith.constant 7.812500e-03 : f32
    %3 = vector.broadcast %cst_1 : f32 to vector<8x1xf32>
    %4 = arith.mulf %2, %3 : vector<8x1xf32>
    %5 = arith.mulf %0, %0 : vector<8x128xf32>
    %cst_2 = arith.constant dense<0.000000e+00> : vector<8xf32>
    %6 = vector.multi_reduction <add>, %5, %cst_2 [1] : vector<8x128xf32> to vector<8xf32>
    %7 = vector.shape_cast %6 : vector<8xf32> to vector<8x1xf32>
    %cst_3 = arith.constant 7.812500e-03 : f32
    %8 = vector.broadcast %cst_3 : f32 to vector<8x1xf32>
    %9 = arith.mulf %7, %8 : vector<8x1xf32>
    %10 = arith.mulf %4, %4 : vector<8x1xf32>
    %11 = arith.subf %9, %10 : vector<8x1xf32>
    %cst_4 = arith.constant 0.000000e+00 : f32
    %12 = vector.broadcast %cst_4 : f32 to vector<8x1xf32>
    %13 = arith.maximumf %11, %12 : vector<8x1xf32>
    %14 = vector.broadcast %4 : vector<8x1xf32> to vector<8x128xf32>
    %15 = arith.subf %0, %14 : vector<8x128xf32>
    %cst_5 = arith.constant 9.99999974E-6 : f32
    %16 = vector.broadcast %cst_5 : f32 to vector<8x1xf32>
    %17 = arith.addf %13, %16 : vector<8x1xf32>
    %18 = math.rsqrt %17 : vector<8x1xf32>
    %19 = vector.broadcast %18 : vector<8x1xf32> to vector<8x128xf32>
    %20 = arith.mulf %15, %19 : vector<8x128xf32>
    %c0_6 = arith.constant 0 : index
    %c0_7 = arith.constant 0 : index
    %21 = vector.load %arg2[%c0_6, %c0_7] : memref<8x64xf32, #tpu.memory_space<vmem>>, vector<8x64xf32>
    %c0_8 = arith.constant 0 : index
    %c0_9 = arith.constant 0 : index
    %22 = vector.load %arg3[%c0_8, %c0_9] : memref<64x256xf32, #tpu.memory_space<vmem>>, vector<64x256xf32>
    %cst_10 = arith.constant dense<0.000000e+00> : vector<8x256xf32>
    %23 = tpu.matmul %21, %22, %cst_10 {dimension_numbers = #tpu.dot_dimension_numbers<[1], [0], [0], [1], [0, 0, 1, 1], [], []>} : vector<8x64xf32>, vector<64x256xf32>, vector<8x256xf32> -> vector<8x256xf32>
    %c0_11 = arith.constant 0 : index
    %c0_12 = arith.constant 0 : index
    %24 = vector.load %arg4[%c0_11, %c0_12] : memref<1x256xf32, #tpu.memory_space<vmem>>, vector<1x256xf32>
    %25 = vector.broadcast %24 : vector<1x256xf32> to vector<8x256xf32>
    %26 = arith.addf %23, %25 : vector<8x256xf32>
    %27 = vector.extract_strided_slice %26 {offsets = [0, 0], sizes = [8, 128], strides = [1, 1]} : vector<8x256xf32> to vector<8x128xf32>
    %28 = vector.extract_strided_slice %26 {offsets = [0, 128], sizes = [8, 128], strides = [1, 1]} : vector<8x256xf32> to vector<8x128xf32>
    %29 = arith.mulf %27, %20 : vector<8x128xf32>
    %30 = arith.addf %29, %28 : vector<8x128xf32>
    %c0_13 = arith.constant 0 : index
    %c0_14 = arith.constant 0 : index
    %31 = vector.load %arg5[%c0_13, %c0_14] : memref<8x128xf32, #tpu.memory_space<vmem>>, vector<8x128xf32>
    tpu.vector_store %arg5[%c0_13, %c0_14], %30 {strides = array<i32>} : memref<8x128xf32, #tpu.memory_space<vmem>>, vector<8x128xf32>,
    return
  }
  func.func @transform_0(%arg0: i32) -> (i32, i32) {
    %c0_i32 = arith.constant 0 : i32
    %c0_i32_0 = arith.constant 0 : i32
    return %arg0, %c0_i32 : i32, i32
  }
  func.func @transform_1(%arg0: i32) -> (i32, i32) {
    %c0_i32 = arith.constant 0 : i32
    %c0_i32_0 = arith.constant 0 : i32
    return %arg0, %c0_i32 : i32, i32
  }
  func.func @transform_2(%arg0: i32) -> (i32, i32) {
    %c0_i32 = arith.constant 0 : i32
    %c0_i32_0 = arith.constant 0 : i32
    %c0_i32_1 = arith.constant 0 : i32
    return %c0_i32, %c0_i32_0 : i32, i32
  }
  func.func @transform_3(%arg0: i32) -> (i32, i32) {
    %c0_i32 = arith.constant 0 : i32
    %c0_i32_0 = arith.constant 0 : i32
    %c0_i32_1 = arith.constant 0 : i32
    return %c0_i32, %c0_i32_0 : i32, i32
  }
  func.func @transform_4(%arg0: i32) -> (i32, i32) {
    %c0_i32 = arith.constant 0 : i32
    %c0_i32_0 = arith.constant 0 : i32
    return %arg0, %c0_i32 : i32, i32
  }
}

</mosaic_0001>

<llo_original>
// kernel: tpu_custom_call.1
$region0: #{tpu_custom_call.1}
  #allocation0 [shape = 'u32[]', space=smem, size = 0x4, offset = 0x4, fixed_abs, tag = 'smem constant byte address 0x4 - core index']
  #allocation1 [shape = 'u32[144,128]{1,0:T(1,128)}', space=vmem, size = 0x12000, scoped, tag = 'internal scratch']
  %s0 = inlined_call_operand.hbm [shape: f32[8,128], index: 0, kind: input, shape index: {}]
  %s1 = inlined_call_operand.hbm [shape: f32[8,64], index: 1, kind: input, shape index: {}]
  %s2 = inlined_call_operand.hbm [shape: f32[64,256], index: 2, kind: input, shape index: {}]
  %s3 = inlined_call_operand.vmem [shape: f32[1,256], index: 3, kind: input, shape index: {}]
  %s4 = inlined_call_operand.hbm [shape: f32[8,128], index: 4, kind: output, shape index: {}]
  %s5 = sld [smem:[#allocation0]]
  $region38: #{tpu_custom_call.1} parent=0
    _
  %s7 = ssub.s32 1, %s5
  %s8 = scalar_select 0, %s7, %s5
  $region1: #{tpu_custom_call.1} parent=0
    #allocation2 [shape = 'u8[4096]{0}', space=vmem, size = 0x1000, scoped, tag = 'input window, operand 0, single buffered']
    #allocation3 [shape = 's32[1]{0}', space=sflag, size = 0x4, scoped, tag = 'scoped memory for tpu_custom_call.1']
    #allocation4 [shape = 's32[1]{0}', space=sflag, size = 0x4, scoped, tag = 'scoped memory for tpu_custom_call.1']
    #allocation5 [shape = 'u8[4096]{0}', space=vmem, size = 0x1000, scoped, tag = 'input window, operand 1, single buffered']
    #allocation6 [shape = 's32[1]{0}', space=sflag, size = 0x4, scoped, tag = 'scoped memory for tpu_custom_call.1']
    #allocation7 [shape = 'u8[65536]{0}', space=vmem, size = 0x10000, scoped, tag = 'input window, operand 2, single buffered']
    #allocation8 [shape = 'u8[4096]{0}', space=vmem, size = 0x1000, scoped, tag = 'output window, operand 0, single buffered']
    %9 = vsyncpa [#allocation3], 0
    %10 = vsyncpa [#allocation6], 0
    %11 = vsyncpa [#allocation4], 0
    // Predicated region
    $region2: #{tpu_custom_call.1} parent=1 // pred_check
      _
    $region3: #{tpu_custom_call.1} parent=1 // pred_check_branch
      %13 = sbr.rel (0) target = $region5
    $region4: #{tpu_custom_call.1} parent=1 // pred_region
      %s15 = ssub.s32 128, 128
      %16 = vsyncadd [#allocation3], %s15
      %s18 = sshll.u32 [#allocation2], 4
      %s19 = int_to_ptr.vmem [resolvable:$true] %s18
      %21 = dma.hbm_to_vmem [thread:$0]  %s0, 128, %s19, [#allocation3]
    $region5: #{tpu_custom_call.1} parent=1 // pred_fallthru
      _
    // Predicated region
    $region6: #{tpu_custom_call.1} parent=1 // pred_check
      _
    $region7: #{tpu_custom_call.1} parent=1 // pred_check_branch
      %23 = sbr.rel (0) target = $region9
    $region8: #{tpu_custom_call.1} parent=1 // pred_region
      %s25 = ssub.s32 128, 128
      %26 = vsyncadd [#allocation6], %s25
      %s28 = sshll.u32 [#allocation5], 4
      %s29 = int_to_ptr.vmem [resolvable:$true] %s28
      %31 = dma.hbm_to_vmem [thread:$0]  %s1, 128, %s29, [#allocation6]
    $region9: #{tpu_custom_call.1} parent=1 // pred_fallthru
      _
    // Predicated region
    $region10: #{tpu_custom_call.1} parent=1 // pred_check
      _
    $region11: #{tpu_custom_call.1} parent=1 // pred_check_branch
      %33 = sbr.rel (0) target = $region13
    $region12: #{tpu_custom_call.1} parent=1 // pred_region
      %s35 = ssub.s32 2048, 2048
      %36 = vsyncadd [#allocation6], %s35
      %s37 = sshll.u32 [#allocation7], 4
      %s38 = int_to_ptr.vmem [resolvable:$true] %s37
      %43 = dma.hbm_to_vmem [thread:$0]  %s2, 2048, %s38, [#allocation6], 256, 256, 16
    $region13: #{tpu_custom_call.1} parent=1 // pred_fallthru
      _
    // Predicated region
    $region14: #{tpu_custom_call.1} parent=1 // pred_check
      _
    $region15: #{tpu_custom_call.1} parent=1 // pred_check_branch
      %45 = sbr.rel (0) target = $region17
    $region16: #{tpu_custom_call.1} parent=1 // pred_region
      _
    $region17: #{tpu_custom_call.1} parent=1 // pred_fallthru
      _
    // Predicated region
    $region18: #{tpu_custom_call.1} parent=1 // pred_check
      _
    $region19: #{tpu_custom_call.1} parent=1 // pred_check_branch
      %47 = sbr.rel (0) target = $region21
    $region20: #{tpu_custom_call.1} parent=1 // pred_region
      %48 = dma.done [#allocation3], 128
    $region21: #{tpu_custom_call.1} parent=1 // pred_fallthru
      _
    // Predicated region
    $region22: #{tpu_custom_call.1} parent=1 // pred_check
      _
    $region23: #{tpu_custom_call.1} parent=1 // pred_check_branch
      %50 = sbr.rel (0) target = $region25
    $region24: #{tpu_custom_call.1} parent=1 // pred_region
      %51 = dma.done [#allocation6], 128
    $region25: #{tpu_custom_call.1} parent=1 // pred_fallthru
      _
    // Predicated region
    $region26: #{tpu_custom_call.1} parent=1 // pred_check
      _
    $region27: #{tpu_custom_call.1} parent=1 // pred_check_branch
      %53 = sbr.rel (0) target = $region29
    $region28: #{tpu_custom_call.1} parent=1 // pred_region
      %54 = dma.done [#allocation6], 2048
    $region29: #{tpu_custom_call.1} parent=1 // pred_fallthru
      _
    %v55 = vld [vmem:[#allocation2] sm:$0xff]
    %56 = vadd.xlane.f32.xlu0 %v55
    %v57 = vpop.xlane.xlu0 %56
    %v58 = vmul.f32 %v57, 0.0078125
    %v59 = vmul.f32 %v55, %v55
    %60 = vadd.xlane.f32.xlu0 %v59
    %v61 = vpop.xlane.xlu0 %60
    %v62 = vmul.f32 %v61, 0.0078125
    %v63 = vmul.f32 %v58, %v58
    %v64 = vsub.f32 %v62, %v63
    %v65 = vmax.f32 %v64, 0.0
    %v66 = vsub.f32 %v55, %v58
    %v67 = vadd.f32 %v65, 1e-05
    %v68 = vrsqrt.pop %v67
    %v69 = vmul.f32 %v66, %v68
    %v70 = vld [vmem:[#allocation5] sm:$0xff]
    %v71 = vld [vmem:[#allocation7] sm:$0xff]
    %v72 = vld [vmem:[#allocation7 + $0x8] sm:$0xff]
    %v73 = vld [vmem:[#allocation7 + $0x10] sm:$0xff]
    %v74 = vld [vmem:[#allocation7 + $0x18] sm:$0xff]
    %v75 = vld [vmem:[#allocation7 + $0x20] sm:$0xff]
    %v76 = vld [vmem:[#allocation7 + $0x28] sm:$0xff]
    %v77 = vld [vmem:[#allocation7 + $0x30] sm:$0xff]
    %v78 = vld [vmem:[#allocation7 + $0x38] sm:$0xff]
    %v79 = vld [vmem:[#allocation7 + $0x40] sm:$0xff]
    %v80 = vld [vmem:[#allocation7 + $0x48] sm:$0xff]
    %v81 = vld [vmem:[#allocation7 + $0x50] sm:$0xff]
    %v82 = vld [vmem:[#allocation7 + $0x58] sm:$0xff]
    %v83 = vld [vmem:[#allocation7 + $0x60] sm:$0xff]
    %v84 = vld [vmem:[#allocation7 + $0x68] sm:$0xff]
    %v85 = vld [vmem:[#allocation7 + $0x70] sm:$0xff]
    %v86 = vld [vmem:[#allocation7 + $0x78] sm:$0xff]
    %v87 = vld [vmem:[%s3] sm:$0x3]
    %v89 = vlaneseq
    %v90 = vshrl.u32 %v89, 7
    %v91 = vsub.s32 0, %v90
    %v92 = vrot.slane %v87, %v91
    %v93 = vlaneseq
    %v94 = vshrl.u32 %v93, 7
    %v95 = vsub.s32 1, %v94
    %v96 = vrot.slane %v87, %v95
    %vm99 = vcmask 523264
    %v101 = vsel %vm99, %v70, 0
    %103 = vmatprep.subr.mxu0 0.0
    %104 = vmatpush1.msra.mxu0 0.0
    %105 = vmatprep.subr.mxu0 0.0
    %106 = vmatpush1.msra.mxu0 0.0
    %107 = vmatprep.subr.mxu0 0.0
    %108 = vmatpush1.msra.mxu0 0.0
    %109 = vmatprep.subr.mxu0 0.0
    %110 = vmatpush1.msra.mxu0 0.0
    %111 = vmatprep.subr.mxu0 0.0
    %112 = vmatpush1.msra.mxu0 0.0
    %113 = vmatprep.subr.mxu0 0.0
    %114 = vmatpush1.msra.mxu0 0.0
    %115 = vmatprep.subr.mxu0 0.0
    %116 = vmatpush1.msra.mxu0 0.0
    %117 = vmatprep.subr.mxu0 0.0
    %118 = vmatpush1.msra.mxu0 0.0
    %119 = vmatprep.subr.mxu0 %v86
    %120 = vmatpush1.msra.mxu0 %v85
    %121 = vmatprep.subr.mxu0 %v84
    %122 = vmatpush1.msra.mxu0 %v83
    %123 = vmatprep.subr.mxu0 %v82
    %124 = vmatpush1.msra.mxu0 %v81
    %125 = vmatprep.subr.mxu0 %v80
    %126 = vmatpush1.msra.mxu0 %v79
    %127 = vmatprep.subr.mxu0 %v78
    %128 = vmatpush1.msra.mxu0 %v77
    %129 = vmatprep.subr.mxu0 %v76
    %130 = vmatpush1.msra.mxu0 %v75
    %131 = vmatprep.subr.mxu0 %v74
    %132 = vmatpush1.msra.mxu0 %v73
    %133 = vmatprep.subr.mxu0 %v72
    %134 = vmatpush1.msra.mxu0 %v71
    %135 = vmatprep.subr.mxu0 0.0
    %136 = vmatpush2.msra.mxu0 0.0
    %137 = vmatprep.subr.mxu0 0.0
    %138 = vmatpush2.msra.mxu0 0.0
    %139 = vmatprep.subr.mxu0 0.0
    %140 = vmatpush2.msra.mxu0 0.0
    %141 = vmatprep.subr.mxu0 0.0
    %142 = vmatpush2.msra.mxu0 0.0
    %143 = vmatprep.subr.mxu0 0.0
    %144 = vmatpush2.msra.mxu0 0.0
    %145 = vmatprep.subr.mxu0 0.0
    %146 = vmatpush2.msra.mxu0 0.0
    %147 = vmatprep.subr.mxu0 0.0
    %148 = vmatpush2.msra.mxu0 0.0
    %149 = vmatprep.subr.mxu0 0.0
    %150 = vmatpush2.msra.mxu0 0.0
    %151 = vmatprep.subr.mxu0 0.0
    %152 = vmatpush2.msra.mxu0 0.0
    %153 = vmatprep.subr.mxu0 0.0
    %154 = vmatpush2.msra.mxu0 0.0
    %155 = vmatprep.subr.mxu0 0.0
    %156 = vmatpush2.msra.mxu0 0.0
    %157 = vmatprep.subr.mxu0 0.0
    %158 = vmatpush2.msra.mxu0 0.0
    %159 = vmatprep.subr.mxu0 0.0
    %160 = vmatpush2.msra.mxu0 0.0
    %161 = vmatprep.subr.mxu0 0.0
    %162 = vmatpush2.msra.mxu0 0.0
    %163 = vmatprep.subr.mxu0 0.0
    %164 = vmatpush2.msra.mxu0 0.0
    %165 = vmatprep.subr.mxu0 0.0
    %166 = vmatpush2.msra.mxu0 0.0
    %167 = vmatprep.mubr.f32.mxu0 0.0
    %168 = vmatmul.mubr.f32.gmra.mxu0 %v101
    %v169 = vpop.f32.mrf.mxu0
    %v170 = vadd.f32 %v92, %v169
    %v171 = vpop.f32.mrf.mxu0
    %v172 = vadd.f32 %v96, %v171
    %173 = vdwg.mxu0
    %v174 = vmul.f32 %v170, %v69
    %v175 = vadd.f32 %v174, %v172
    %176 = vst [vmem:[#allocation8] sm:$0xff] %v175
    // Predicated region
    $region30: #{tpu_custom_call.1} parent=1 // pred_check
      _
    $region31: #{tpu_custom_call.1} parent=1 // pred_check_branch
      %178 = sbr.rel (0) target = $region33
    $region32: #{tpu_custom_call.1} parent=1 // pred_region
      %s180 = ssub.s32 128, 128
      %181 = vsyncadd [#allocation4], %s180
      %s183 = sshll.u32 [#allocation8], 4
      %s184 = int_to_ptr.vmem [resolvable:$true] %s183
      %186 = dma.vmem_to_hbm [thread:$0]  %s184, 128, %s4, [#allocation4]
    $region33: #{tpu_custom_call.1} parent=1 // pred_fallthru
      _
    // Predicated region
    $region34: #{tpu_custom_call.1} parent=1 // pred_check
      _
    $region35: #{tpu_custom_call.1} parent=1 // pred_check_branch
      %188 = sbr.rel (0) target = $region37
    $region36: #{tpu_custom_call.1} parent=1 // pred_region
      %189 = dma.done [#allocation4], 128
    $region37: #{tpu_custom_call.1} parent=1 // pred_fallthru
      _
    %190 = vsyncpa [#allocation3], 1
    %191 = vsyncpa [#allocation6], 1
    %192 = vsyncpa [#allocation4], 1

</llo_original>
